<compile_context>
chip_gen: v6e
topology: v6e:2x2x1
jax: 0.10.0
libtpu: 0.0.40
codegen_flags: <defaults>
</compile_context>

<pallas_src>
import functools

import jax
import jax.numpy as jnp
from jax.experimental import pallas as pl
from jax.experimental.pallas import tpu as pltpu


# ---------------------------------------------------------------------------
# Pallas kernel: grid = (row_tiles, n_codebooks), codebook axis innermost,
# residual carried per row tile in VMEM scratch.
# ---------------------------------------------------------------------------
def _rvq_kernel(inv_denom, weights_resident,
                z_ref, m_ref, s_ref, cn_ref, p_ref, b_out_ref,
                zq_ref, codes_ref, lat_ref, loss_ref,
                resid_ref):
    n = pl.program_id(1)
    TM, D = resid_ref.shape
    cd = lat_ref.shape[1]
    KPC = m_ref.shape[-1]
    Kp = KPC - cd                       # lane-aligned (padded) score width
    K = cn_ref.shape[-1]                # true codebook size
    w = n if weights_resident else 0    # resident weights: pick the codebook slab in VMEM

    @pl.when(n == 0)
    def _init():
        resid_ref[...] = z_ref[...]
        zq_ref[...] = jnp.zeros_like(zq_ref)
        loss_ref[...] = jnp.zeros_like(loss_ref)

    r = resid_ref[...]                                                         # [TM, D] f32

    # One D-contraction MXU pass yields both the NN score and the projected latents:
    #   full = r @ [M | W_in] + [s | b_in],  M = W_in @ c_n^T (codebook L2 norm folded in).
    full = jnp.dot(r, m_ref[w], preferred_element_type=jnp.float32) + s_ref[w]  # [TM, Kp+cd]
    score = full[:, :Kp]                                                       # padded cols = -1e30
    z_e = full[:, Kp:]                                                         # [TM, cd]

    idx = jnp.argmax(score, axis=1, keepdims=True).astype(jnp.int32)           # [TM, 1]
    smax = jnp.max(score, axis=1, keepdims=True)                               # z_e . c_sel / ||c_sel||

    # One-hot selection; dtype follows P so the out_proj matmul can run in bf16 on the MXU.
    onehot = (idx == jax.lax.broadcasted_iota(jnp.int32, (TM, K), 1)).astype(p_ref.dtype)

    # Fused gather + out_proj (straight-through forward value of z_q); f32 accumulate.
    z_q_proj = (jnp.dot(onehot, p_ref[w], preferred_element_type=jnp.float32)
                + b_out_ref[w])                                                # [TM, D]

    # Loss without the [TM,K]x[K,cd] gather matmul:
    #   sum||z_e - c_sel||^2 = sum z_e^2 - 2*sum(smax * ||c_sel||) + sum ||c_sel||^2
    cn_sel = jnp.sum(onehot.astype(jnp.float32) * cn_ref[w], axis=1, keepdims=True)  # [TM, 1]
    loss_tile = (jnp.sum(z_e * z_e)
                 - 2.0 * jnp.sum(smax * cn_sel)
                 + jnp.sum(cn_sel * cn_sel))
    loss_ref[...] += loss_tile * inv_denom

    zq_ref[...] += z_q_proj
    resid_ref[...] = r - z_q_proj                                              # residual stays f32
    codes_ref[...] = idx.reshape(1, 1, TM)                                     # lane-dense codes
    lat_ref[...] = jnp.transpose(z_e)[None, :, :]                              # [1, cd, TM] lane-dense


# ---------------------------------------------------------------------------
# Generation-aware tiling / VMEM budget.
# ---------------------------------------------------------------------------
def _hw_budget():
    """Returns (row-tile cap, vmem_limit_bytes) from the TPU generation's VMEM capacity."""
    try:
        cap = int(pltpu.get_tpu_info().vmem_capacity_bytes)
    except Exception:
        cap = None
    if cap is None:
        return 512, 40 * 1024 * 1024                       # safe on every generation
    if cap <= 64 * 1024 * 1024:                            # v7x-class: 64 MiB / TensorCore
        return 256, min(40 * 1024 * 1024, (cap * 5) // 8)
    return 512, min(96 * 1024 * 1024, (cap * 3) // 4)      # v5e / v6e: 128 MiB physical


def _pick_row_tile(bt, cap):
    tm = cap
    while tm >= 128:
        if bt % tm == 0:
            return tm
        tm //= 2
    return bt  # small / ragged inputs: a single row tile


# ---------------------------------------------------------------------------
# Wrapper: algebraic fusion / parameter plumbing + pallas_call.
# ---------------------------------------------------------------------------
def rvq_forward(z, w_in, b_in, codebook, w_out, b_out, out_proj_bf16=False):
    """z: [B, D, T] (PyTorch Conv1d convention). Returns dict like the module."""
    tm_cap, vmem_limit = _hw_budget()
    return _rvq_forward(z, w_in, b_in, codebook, w_out, b_out,
                        tm_cap, vmem_limit, bool(out_proj_bf16))


@functools.partial(jax.jit, static_argnums=(6, 7, 8))
def _rvq_forward(z, w_in, b_in, codebook, w_out, b_out, tm_cap, vmem_limit, out_proj_bf16):
    B, D, T = z.shape
    N, _, cd = w_in.shape
    K = codebook.shape[1]
    BT = B * T

    TM = _pick_row_tile(BT, tm_cap)
    R = BT // TM
    Kp = ((K + 127) // 128) * 128       # lane-align score block so the z_e slice is aligned
    KPC = Kp + cd

    z_rows = jnp.transpose(z, (0, 2, 1)).astype(jnp.float32).reshape(BT, D)    # [BT, D]

    # --- wrapper-side algebraic fusion ---------------------------------------
    w_in32 = w_in.astype(jnp.float32)
    b_in32 = b_in.astype(jnp.float32)
    cb32 = codebook.astype(jnp.float32)
    cnorm = jnp.sqrt(jnp.sum(cb32 * cb32, axis=2))                             # [N, K]  ||c_k||
    c_n = cb32 / jnp.maximum(cnorm, 1e-12)[..., None]                          # [N, K, cd]

    m_score = jnp.einsum("ndc,nkc->ndk", w_in32, c_n)                          # [N, D, K]
    s_score = jnp.einsum("noc,nkc->nok", b_in32, c_n)                          # [N, 1, K]
    if Kp > K:  # padded score columns can never win the argmax
        m_score = jnp.pad(m_score, ((0, 0), (0, 0), (0, Kp - K)))
        s_score = jnp.pad(s_score, ((0, 0), (0, 0), (0, Kp - K)), constant_values=-1e30)
    m_big = jnp.concatenate([m_score, w_in32], axis=2)                         # [N, D, Kp+cd]
    s_big = jnp.concatenate([s_score, b_in32], axis=2)                         # [N, 1, Kp+cd]

    p_mat = jnp.einsum("nkc,ncd->nkd", cb32, w_out.astype(jnp.float32))        # [N, K, D]
    if out_proj_bf16:
        p_mat = p_mat.astype(jnp.bfloat16)   # onehot gather exact; z_q moves by ~1e-3
    b_out32 = b_out.astype(jnp.float32)                                        # [N, 1, D]
    cn_row = cnorm[:, None, :]                                                 # [N, 1, K]

    inv_denom = 1.0 / float(BT * cd)

    # --- weight residency: constant-index blocks are DMA'd exactly once -------
    p_bytes = 2 if out_proj_bf16 else 4
    w_res_bytes = 4 * N * (D * KPC + KPC + K + D) + p_bytes * N * K * D
    step_bytes = 4 * TM * (5 * D + 4 * KPC)   # per-step tiles + score/onehot temporaries (rough)
    weights_resident = (2 * w_res_bytes + step_bytes) <= int(0.8 * vmem_limit)

    if weights_resident:
        def wmap(r, n):
            return (0, 0, 0)
        m_spec = pl.BlockSpec((N, D, KPC), wmap)
        s_spec = pl.BlockSpec((N, 1, KPC), wmap)
        cn_spec = pl.BlockSpec((N, 1, K), wmap)
        p_spec = pl.BlockSpec((N, K, D), wmap)
        bo_spec = pl.BlockSpec((N, 1, D), wmap)
    else:
        # TODO(synk): could additionally store m_big in bf16 here to halve per-step DMA.
        def wmap(r, n):
            return (n, 0, 0)
        m_spec = pl.BlockSpec((1, D, KPC), wmap)
        s_spec = pl.BlockSpec((1, 1, KPC), wmap)
        cn_spec = pl.BlockSpec((1, 1, K), wmap)
        p_spec = pl.BlockSpec((1, K, D), wmap)
        bo_spec = pl.BlockSpec((1, 1, D), wmap)

    in_specs = [
        pl.BlockSpec((TM, D), lambda r, n: (r, 0)),        # residual seed z (read at n == 0)
        m_spec, s_spec, cn_spec, p_spec, bo_spec,
    ]
    out_shapes = (
        jax.ShapeDtypeStruct((BT, D), jnp.float32),        # z_q rows (accumulated over n)
        jax.ShapeDtypeStruct((N, R, TM), jnp.int32),       # codes, lane-dense (rows on lanes)
        jax.ShapeDtypeStruct((N, cd, BT), jnp.float32),    # latents, lane-dense (rows on lanes)
        jax.ShapeDtypeStruct((R, 1, 1), jnp.float32),      # per-row-tile loss partials
    )
    out_specs = (
        pl.BlockSpec((TM, D), lambda r, n: (r, 0)),        # resident over codebook axis
        pl.BlockSpec((1, 1, TM), lambda r, n: (n, r, 0)),
        pl.BlockSpec((1, cd, TM), lambda r, n: (n, 0, r)),
        pl.BlockSpec((1, 1, 1), lambda r, n: (r, 0, 0)),   # resident over codebook axis
    )

    zq, codes, lat, loss_part = pl.pallas_call(
        functools.partial(_rvq_kernel, inv_denom, weights_resident),
        out_shape=out_shapes,
        grid_spec=pltpu.PrefetchScalarGridSpec(
            num_scalar_prefetch=0,
            grid=(R, N),                                   # codebook axis innermost
            in_specs=in_specs,
            out_specs=out_specs,
            scratch_shapes=[pltpu.VMEM((TM, D), jnp.float32)],  # residual carry per row tile
        ),
        compiler_params=pltpu.CompilerParams(
            dimension_semantics=("parallel", "arbitrary"),
            vmem_limit_bytes=vmem_limit),
    )(z_rows, m_big, s_big, cn_row, p_mat, b_out32)

    z_q = jnp.transpose(zq.reshape(B, T, D), (0, 2, 1))                        # [B, D, T]
    codes_bnt = jnp.transpose(codes.reshape(N, B, T), (1, 0, 2))               # [B, N, T]
    latents = jnp.transpose(lat.reshape(N, cd, B, T), (2, 0, 1, 3)).reshape(B, N * cd, T)
    loss = jnp.sum(loss_part)
    return {
        "z_q": z_q,
        "codes": codes_bnt,
        "latents": latents,
        "commitment_loss": loss,
        "codebook_loss": loss,     # identical forward value in eval mode
    }


# ---------------------------------------------------------------------------
# Deterministic synthetic parameters (weight_norm reparametrization done here,
# as plain-JAX glue; the kernel consumes the effective conv weights).
# ---------------------------------------------------------------------------
def make_params(key, D, N, K, cd):
    w_in_l, b_in_l, cb_l, w_out_l, b_out_l = [], [], [], [], []
    for i in range(N):
        k = jax.random.split(jax.random.fold_in(key, i), 8)
        # in_proj: weight_norm(Conv1d(D, cd, 1)) -> W[c,:] = g[c] * v[c,:] / ||v[c,:]||
        v_in = jax.random.normal(k[0], (cd, D), jnp.float32) * 0.2
        g_in = 1.0 + 0.05 * jax.random.normal(k[1], (cd,), jnp.float32)
        w_in_eff = g_in[:, None] * v_in / jnp.linalg.norm(v_in, axis=1, keepdims=True)
        b_in = 0.01 * jax.random.normal(k[2], (cd,), jnp.float32)
        # out_proj: weight_norm(Conv1d(cd, D, 1))
        v_out = jax.random.normal(k[3], (D, cd), jnp.float32) * 0.2
        g_out = 1.0 + 0.05 * jax.random.normal(k[4], (D,), jnp.float32)
        w_out_eff = g_out[:, None] * v_out / jnp.linalg.norm(v_out, axis=1, keepdims=True)
        b_out = 0.01 * jax.random.normal(k[5], (D,), jnp.float32)
        # codebook: nn.Embedding(K, cd) ~ N(0, 1)
        cb = jax.random.normal(k[6], (K, cd), jnp.float32)

        w_in_l.append(w_in_eff.T)          # [D, cd]  for r @ W
        b_in_l.append(b_in[None, :])       # [1, cd]
        w_out_l.append(w_out_eff.T)        # [cd, D]
        b_out_l.append(b_out[None, :])     # [1, D]
        cb_l.append(cb)

    return (jnp.stack(w_in_l), jnp.stack(b_in_l), jnp.stack(cb_l),
            jnp.stack(w_out_l), jnp.stack(b_out_l))


# ---------------------------------------------------------------------------
# Pure-JAX reference (mirrors the PyTorch forward) for a correctness check.
# ---------------------------------------------------------------------------
def rvq_reference(z, w_in, b_in, codebook, w_out, b_out):
    B, D, T = z.shape
    N, _, cd = w_in.shape
    residual = z
    z_q_acc = jnp.zeros_like(z)
    commit = 0.0
    cbl = 0.0
    codes, lats = [], []
    for i in range(N):
        z_e = jnp.einsum("bdt,dc->bct", residual, w_in[i]) + b_in[i, 0][None, :, None]
        enc = jnp.transpose(z_e, (0, 2, 1)).reshape(B * T, cd)
        e_n = enc / jnp.maximum(jnp.linalg.norm(enc, axis=1, keepdims=True), 1e-12)
        cb = codebook[i]
        c_n = cb / jnp.maximum(jnp.linalg.norm(cb, axis=1, keepdims=True), 1e-12)
        dist = (jnp.sum(e_n ** 2, 1, keepdims=True)
                - 2.0 * e_n @ c_n.T
                + jnp.sum(c_n ** 2, 1, keepdims=True).T)
        idx = jnp.argmax(-dist, axis=1)
        zq_cd = cb[idx]
        zq_bct = jnp.transpose(zq_cd.reshape(B, T, cd), (0, 2, 1))
        loss_i = jnp.mean(jnp.mean((z_e - zq_bct) ** 2, axis=(1, 2)))
        commit = commit + loss_i
        cbl = cbl + loss_i
        zq_i = jnp.einsum("bct,cd->bdt", zq_bct, w_out[i]) + b_out[i, 0][None, :, None]
        z_q_acc = z_q_acc + zq_i
        residual = residual - zq_i
        codes.append(idx.reshape(B, T).astype(jnp.int32))
        lats.append(z_e)
    return {
        "z_q": z_q_acc,
        "codes": jnp.stack(codes, axis=1),
        "latents": jnp.concatenate(lats, axis=1),
        "commitment_loss": commit,
        "codebook_loss": cbl,
    }


if __name__ == "__main__":
    # small, module-consistent shapes
    B, D, T = 2, 32, 16          # input_dim = 32
    N, K, cd = 4, 128, 8         # n_codebooks = 4, codebook_size = 128, codebook_dim = 8

    key = jax.random.PRNGKey(0)
    kz, kp = jax.random.split(key)
    z = jax.random.normal(kz, (B, D, T), jnp.float32)
    w_in, b_in, codebook, w_out, b_out = make_params(kp, D, N, K, cd)

    out = rvq_forward(z, w_in, b_in, codebook, w_out, b_out)
    out = jax.tree_util.tree_map(jax.block_until_ready, out)

    ref = rvq_reference(z, w_in, b_in, codebook, w_out, b_out)

    assert out["z_q"].shape == (B, D, T)
    assert out["codes"].shape == (B, N, T)
    assert out["latents"].shape == (B, N * cd, T)
    assert jnp.array_equal(out["codes"], ref["codes"])
    assert jnp.allclose(out["z_q"], ref["z_q"], atol=1e-4, rtol=1e-4)
    assert jnp.allclose(out["latents"], ref["latents"], atol=1e-4, rtol=1e-4)
    assert jnp.allclose(out["commitment_loss"], ref["commitment_loss"], atol=1e-4, rtol=1e-4)
    assert jnp.allclose(out["codebook_loss"], ref["codebook_loss"], atol=1e-4, rtol=1e-4)

    # bf16 out_proj fast path (v6e/v7x MXU): score path stays f32, so the first codebook's
    # codes are bit-stable; later stages may drift by ~1e-3 in z_q (residual perturbation).
    out_bf16 = rvq_forward(z, w_in, b_in, codebook, w_out, b_out, out_proj_bf16=True)
    out_bf16 = jax.tree_util.tree_map(jax.block_until_ready, out_bf16)
    assert out_bf16["z_q"].shape == (B, D, T)
    assert jnp.array_equal(out_bf16["codes"][:, 0, :], ref["codes"][:, 0, :])
    assert bool(jnp.all(jnp.isfinite(out_bf16["z_q"])))
    assert bool(jnp.isfinite(out_bf16["commitment_loss"]))

    print("KERNEL_OK")
</pallas_src>

<mosaic_0001>
module attributes {stable_mosaic.version = 11 : i64} {
  func.func @_rvq_kernel(%arg0: i32, %arg1: i32, %arg2: memref<32x32xf32, #tpu.memory_space<vmem>>, %arg3: memref<4x32x136xf32, #tpu.memory_space<vmem>>, %arg4: memref<4x1x136xf32, #tpu.memory_space<vmem>>, %arg5: memref<4x1x128xf32, #tpu.memory_space<vmem>>, %arg6: memref<4x128x32xf32, #tpu.memory_space<vmem>>, %arg7: memref<4x1x32xf32, #tpu.memory_space<vmem>>, %arg8: memref<32x32xf32, #tpu.memory_space<vmem>>, %arg9: memref<1x1x32xi32, #tpu.memory_space<vmem>>, %arg10: memref<1x8x32xf32, #tpu.memory_space<vmem>>, %arg11: memref<1x1x1xf32, #tpu.memory_space<vmem>>, %arg12: memref<32x32xf32, #tpu.memory_space<vmem>>) attributes {dimension_semantics = [#tpu.dimension_semantics<parallel>, #tpu.dimension_semantics<arbitrary>], iteration_bounds = array<i64: 1, 4>, scalar_prefetch = 0 : i64, scratch_operands = 1 : i64, tpu.core_type = #tpu.core_type<tc>, window_params = [{transform_indices = @transform_0, window_bounds = array<i64: 32, 32>}, {pipeline_mode = #tpu.pipeline_mode<synchronous>, transform_indices = @transform_1, window_bounds = array<i64: 4, 32, 136>}, {pipeline_mode = #tpu.pipeline_mode<synchronous>, transform_indices = @transform_2, window_bounds = array<i64: 4, 1, 136>}, {pipeline_mode = #tpu.pipeline_mode<synchronous>, transform_indices = @transform_3, window_bounds = array<i64: 4, 1, 128>}, {pipeline_mode = #tpu.pipeline_mode<synchronous>, transform_indices = @transform_4, window_bounds = array<i64: 4, 128, 32>}, {pipeline_mode = #tpu.pipeline_mode<synchronous>, transform_indices = @transform_5, window_bounds = array<i64: 4, 1, 32>}, {transform_indices = @transform_6, window_bounds = array<i64: 32, 32>}, {transform_indices = @transform_7, window_bounds = array<i64: 1, 1, 32>}, {transform_indices = @transform_8, window_bounds = array<i64: 1, 8, 32>}, {transform_indices = @transform_9, window_bounds = array<i64: 1, 1, 1>}]} {
    %c0_i32 = arith.constant 0 : i32
    %0 = arith.cmpi eq, %arg1, %c0_i32 : i32
    %1 = arith.extui %0 : i1 to i32
    %c0_i32_0 = arith.constant 0 : i32
    %2 = arith.cmpi ne, %1, %c0_i32_0 : i32
    scf.if %2 {
      %c0_38 = arith.constant 0 : index
      %c0_39 = arith.constant 0 : index
      %73 = vector.load %arg2[%c0_38, %c0_39] : memref<32x32xf32, #tpu.memory_space<vmem>>, vector<32x32xf32>
      %c0_40 = arith.constant 0 : index
      %c0_41 = arith.constant 0 : index
      %74 = vector.load %arg12[%c0_40, %c0_41] : memref<32x32xf32, #tpu.memory_space<vmem>>, vector<32x32xf32>
      tpu.vector_store %arg12[%c0_40, %c0_41], %73 {strides = array<i32>} : memref<32x32xf32, #tpu.memory_space<vmem>>, vector<32x32xf32>,
      %cst_42 = arith.constant 0.000000e+00 : f32
      %75 = vector.broadcast %cst_42 : f32 to vector<32x32xf32>
      %c0_43 = arith.constant 0 : index
      %c0_44 = arith.constant 0 : index
      %76 = vector.load %arg8[%c0_43, %c0_44] : memref<32x32xf32, #tpu.memory_space<vmem>>, vector<32x32xf32>
      tpu.vector_store %arg8[%c0_43, %c0_44], %75 {strides = array<i32>} : memref<32x32xf32, #tpu.memory_space<vmem>>, vector<32x32xf32>,
      %cst_45 = arith.constant 0.000000e+00 : f32
      %77 = vector.broadcast %cst_45 : f32 to vector<1x1x1xf32>
      %c0_46 = arith.constant 0 : index
      %c0_47 = arith.constant 0 : index
      %c0_48 = arith.constant 0 : index
      %78 = vector.load %arg11[%c0_46, %c0_47, %c0_48] : memref<1x1x1xf32, #tpu.memory_space<vmem>>, vector<1x1x1xf32>
      tpu.vector_store %arg11[%c0_46, %c0_47, %c0_48], %77 {strides = array<i32>} : memref<1x1x1xf32, #tpu.memory_space<vmem>>, vector<1x1x1xf32>,
    } else {
    }
    %c0 = arith.constant 0 : index
    %c0_1 = arith.constant 0 : index
    %3 = vector.load %arg12[%c0, %c0_1] : memref<32x32xf32, #tpu.memory_space<vmem>>, vector<32x32xf32>
    %4 = arith.index_cast %arg1 : i32 to index
    %c0_2 = arith.constant 0 : index
    %c0_3 = arith.constant 0 : index
    %5 = vector.load %arg3[%4, %c0_2, %c0_3] : memref<4x32x136xf32, #tpu.memory_space<vmem>>, vector<1x32x136xf32>
    %6 = vector.shape_cast %5 : vector<1x32x136xf32> to vector<32x136xf32>
    %cst = arith.constant dense<0.000000e+00> : vector<32x136xf32>
    %7 = tpu.matmul %3, %6, %cst {dimension_numbers = #tpu.dot_dimension_numbers<[1], [0], [0], [1], [0, 0, 1, 1], [], []>} : vector<32x32xf32>, vector<32x136xf32>, vector<32x136xf32> -> vector<32x136xf32>
    %8 = arith.index_cast %arg1 : i32 to index
    %c0_4 = arith.constant 0 : index
    %c0_5 = arith.constant 0 : index
    %9 = vector.load %arg4[%8, %c0_4, %c0_5] : memref<4x1x136xf32, #tpu.memory_space<vmem>>, vector<1x1x136xf32>
    %10 = vector.shape_cast %9 : vector<1x1x136xf32> to vector<1x136xf32>
    %11 = vector.broadcast %10 : vector<1x136xf32> to vector<32x136xf32>
    %12 = arith.addf %7, %11 : vector<32x136xf32>
    %13 = vector.extract_strided_slice %12 {offsets = [0, 0], sizes = [32, 128], strides = [1, 1]} : vector<32x136xf32> to vector<32x128xf32>
    %14 = vector.extract_strided_slice %12 {offsets = [0, 128], sizes = [32, 8], strides = [1, 1]} : vector<32x136xf32> to vector<32x8xf32>
    %15 = tpu.reduce_index %13 {axis = 1 : i32, kind = #tpu.reduction_kind<arg_max>} : vector<32x128xf32> -> vector<32xi32>
    %16 = vector.shape_cast %15 : vector<32xi32> to vector<32x1xi32>
    %cst_6 = arith.constant dense<0xFF800000> : vector<32xf32>
    %17 = vector.multi_reduction <maximumf>, %13, %cst_6 [1] : vector<32x128xf32> to vector<32xf32>
    %18 = vector.shape_cast %17 : vector<32xf32> to vector<32x1xf32>
    %19 = tpu.iota {dimensions = array<i32: 1>} : vector<32x128xi32>
    %20 = vector.broadcast %16 : vector<32x1xi32> to vector<32x128xi32>
    %21 = arith.cmpi eq, %20, %19 : vector<32x128xi32>
    %22 = arith.extui %21 : vector<32x128xi1> to vector<32x128xi32>
    %23 = arith.sitofp %22 : vector<32x128xi32> to vector<32x128xf32>
    %24 = arith.index_cast %arg1 : i32 to index
    %c0_7 = arith.constant 0 : index
    %c0_8 = arith.constant 0 : index
    %25 = vector.load %arg6[%24, %c0_7, %c0_8] : memref<4x128x32xf32, #tpu.memory_space<vmem>>, vector<1x128x32xf32>
    %26 = vector.shape_cast %25 : vector<1x128x32xf32> to vector<128x32xf32>
    %cst_9 = arith.constant dense<0.000000e+00> : vector<32x32xf32>
    %27 = tpu.matmul %23, %26, %cst_9 {dimension_numbers = #tpu.dot_dimension_numbers<[1], [0], [0], [1], [0, 0, 1, 1], [], []>} : vector<32x128xf32>, vector<128x32xf32>, vector<32x32xf32> -> vector<32x32xf32>
    %28 = arith.index_cast %arg1 : i32 to index
    %c0_10 = arith.constant 0 : index
    %c0_11 = arith.constant 0 : index
    %29 = vector.load %arg7[%28, %c0_10, %c0_11] : memref<4x1x32xf32, #tpu.memory_space<vmem>>, vector<1x1x32xf32>
    %30 = vector.shape_cast %29 : vector<1x1x32xf32> to vector<1x32xf32>
    %31 = vector.broadcast %30 : vector<1x32xf32> to vector<32x32xf32>
    %32 = arith.addf %27, %31 : vector<32x32xf32>
    %33 = arith.index_cast %arg1 : i32 to index
    %c0_12 = arith.constant 0 : index
    %c0_13 = arith.constant 0 : index
    %34 = vector.load %arg5[%33, %c0_12, %c0_13] : memref<4x1x128xf32, #tpu.memory_space<vmem>>, vector<1x1x128xf32>
    %35 = vector.shape_cast %34 : vector<1x1x128xf32> to vector<1x128xf32>
    %36 = vector.broadcast %35 : vector<1x128xf32> to vector<32x128xf32>
    %37 = arith.mulf %23, %36 : vector<32x128xf32>
    %cst_14 = arith.constant dense<0.000000e+00> : vector<32xf32>
    %38 = vector.multi_reduction <add>, %37, %cst_14 [1] : vector<32x128xf32> to vector<32xf32>
    %39 = vector.shape_cast %38 : vector<32xf32> to vector<32x1xf32>
    %40 = arith.mulf %14, %14 : vector<32x8xf32>
    %41 = vector.shape_cast %40 : vector<32x8xf32> to vector<1x32x8xf32>
    %cst_15 = arith.constant dense<0.000000e+00> : vector<1xf32>
    %42 = vector.multi_reduction <add>, %41, %cst_15 [1, 2] : vector<1x32x8xf32> to vector<1xf32>
    %43 = vector.shape_cast %42 : vector<1xf32> to vector<1x1x1xf32>
    %44 = vector.extract %43[0, 0, 0] : f32 from vector<1x1x1xf32>
    %45 = arith.mulf %18, %39 : vector<32x1xf32>
    %46 = vector.shape_cast %45 : vector<32x1xf32> to vector<1x32x1xf32>
    %cst_16 = arith.constant dense<0.000000e+00> : vector<1xf32>
    %47 = vector.multi_reduction <add>, %46, %cst_16 [1, 2] : vector<1x32x1xf32> to vector<1xf32>
    %48 = vector.shape_cast %47 : vector<1xf32> to vector<1x1x1xf32>
    %49 = vector.extract %48[0, 0, 0] : f32 from vector<1x1x1xf32>
    %cst_17 = arith.constant 2.000000e+00 : f32
    %50 = arith.mulf %cst_17, %49 : f32
    %51 = arith.subf %44, %50 : f32
    %52 = arith.mulf %39, %39 : vector<32x1xf32>
    %53 = vector.shape_cast %52 : vector<32x1xf32> to vector<1x32x1xf32>
    %cst_18 = arith.constant dense<0.000000e+00> : vector<1xf32>
    %54 = vector.multi_reduction <add>, %53, %cst_18 [1, 2] : vector<1x32x1xf32> to vector<1xf32>
    %55 = vector.shape_cast %54 : vector<1xf32> to vector<1x1x1xf32>
    %56 = vector.extract %55[0, 0, 0] : f32 from vector<1x1x1xf32>
    %57 = arith.addf %51, %56 : f32
    %c0_19 = arith.constant 0 : index
    %c0_20 = arith.constant 0 : index
    %c0_21 = arith.constant 0 : index
    %58 = vector.load %arg11[%c0_19, %c0_20, %c0_21] : memref<1x1x1xf32, #tpu.memory_space<vmem>>, vector<1x1x1xf32>
    %cst_22 = arith.constant 3.906250e-03 : f32
    %59 = arith.mulf %57, %cst_22 : f32
    %60 = vector.broadcast %59 : f32 to vector<1x1x1xf32>
    %61 = arith.addf %58, %60 : vector<1x1x1xf32>
    %c0_23 = arith.constant 0 : index
    %c0_24 = arith.constant 0 : index
    %c0_25 = arith.constant 0 : index
    %62 = vector.load %arg11[%c0_23, %c0_24, %c0_25] : memref<1x1x1xf32, #tpu.memory_space<vmem>>, vector<1x1x1xf32>
    tpu.vector_store %arg11[%c0_23, %c0_24, %c0_25], %61 {strides = array<i32>} : memref<1x1x1xf32, #tpu.memory_space<vmem>>, vector<1x1x1xf32>,
    %c0_26 = arith.constant 0 : index
    %c0_27 = arith.constant 0 : index
    %63 = vector.load %arg8[%c0_26, %c0_27] : memref<32x32xf32, #tpu.memory_space<vmem>>, vector<32x32xf32>
    %64 = arith.addf %63, %32 : vector<32x32xf32>
    %c0_28 = arith.constant 0 : index
    %c0_29 = arith.constant 0 : index
    %65 = vector.load %arg8[%c0_28, %c0_29] : memref<32x32xf32, #tpu.memory_space<vmem>>, vector<32x32xf32>
    tpu.vector_store %arg8[%c0_28, %c0_29], %64 {strides = array<i32>} : memref<32x32xf32, #tpu.memory_space<vmem>>, vector<32x32xf32>,
    %66 = arith.subf %3, %32 : vector<32x32xf32>
    %c0_30 = arith.constant 0 : index
    %c0_31 = arith.constant 0 : index
    %67 = vector.load %arg12[%c0_30, %c0_31] : memref<32x32xf32, #tpu.memory_space<vmem>>, vector<32x32xf32>
    tpu.vector_store %arg12[%c0_30, %c0_31], %66 {strides = array<i32>} : memref<32x32xf32, #tpu.memory_space<vmem>>, vector<32x32xf32>,
    %68 = vector.shape_cast %16 : vector<32x1xi32> to vector<1x1x32xi32>
    %c0_32 = arith.constant 0 : index
    %c0_33 = arith.constant 0 : index
    %c0_34 = arith.constant 0 : index
    %69 = vector.load %arg9[%c0_32, %c0_33, %c0_34] : memref<1x1x32xi32, #tpu.memory_space<vmem>>, vector<1x1x32xi32>
    tpu.vector_store %arg9[%c0_32, %c0_33, %c0_34], %68 {strides = array<i32>} : memref<1x1x32xi32, #tpu.memory_space<vmem>>, vector<1x1x32xi32>,
    %70 = tpu.transpose %14, [1, 0] : vector<32x8xf32> -> vector<8x32xf32>
    %71 = vector.shape_cast %70 : vector<8x32xf32> to vector<1x8x32xf32>
    %c0_35 = arith.constant 0 : index
    %c0_36 = arith.constant 0 : index
    %c0_37 = arith.constant 0 : index
    %72 = vector.load %arg10[%c0_35, %c0_36, %c0_37] : memref<1x8x32xf32, #tpu.memory_space<vmem>>, vector<1x8x32xf32>
    tpu.vector_store %arg10[%c0_35, %c0_36, %c0_37], %71 {strides = array<i32>} : memref<1x8x32xf32, #tpu.memory_space<vmem>>, vector<1x8x32xf32>,
    return
  }
  func.func @transform_0(%arg0: i32, %arg1: i32) -> (i32, i32) {
    %c0_i32 = arith.constant 0 : i32
    %c0_i32_0 = arith.constant 0 : i32
    return %arg0, %c0_i32 : i32, i32
  }
  func.func @transform_1(%arg0: i32, %arg1: i32) -> (i32, i32, i32) {
    %c0_i32 = arith.constant 0 : i32
    %c0_i32_0 = arith.constant 0 : i32
    %c0_i32_1 = arith.constant 0 : i32
    %c0_i32_2 = arith.constant 0 : i32
    return %c0_i32, %c0_i32_0, %c0_i32_1 : i32, i32, i32
  }
  func.func @transform_2(%arg0: i32, %arg1: i32) -> (i32, i32, i32) {
    %c0_i32 = arith.constant 0 : i32
    %c0_i32_0 = arith.constant 0 : i32
    %c0_i32_1 = arith.constant 0 : i32
    %c0_i32_2 = arith.constant 0 : i32
    return %c0_i32, %c0_i32_0, %c0_i32_1 : i32, i32, i32
  }
  func.func @transform_3(%arg0: i32, %arg1: i32) -> (i32, i32, i32) {
    %c0_i32 = arith.constant 0 : i32
    %c0_i32_0 = arith.constant 0 : i32
    %c0_i32_1 = arith.constant 0 : i32
    %c0_i32_2 = arith.constant 0 : i32
    return %c0_i32, %c0_i32_0, %c0_i32_1 : i32, i32, i32
  }
  func.func @transform_4(%arg0: i32, %arg1: i32) -> (i32, i32, i32) {
    %c0_i32 = arith.constant 0 : i32
    %c0_i32_0 = arith.constant 0 : i32
    %c0_i32_1 = arith.constant 0 : i32
    %c0_i32_2 = arith.constant 0 : i32
    return %c0_i32, %c0_i32_0, %c0_i32_1 : i32, i32, i32
  }
  func.func @transform_5(%arg0: i32, %arg1: i32) -> (i32, i32, i32) {
    %c0_i32 = arith.constant 0 : i32
    %c0_i32_0 = arith.constant 0 : i32
    %c0_i32_1 = arith.constant 0 : i32
    %c0_i32_2 = arith.constant 0 : i32
    return %c0_i32, %c0_i32_0, %c0_i32_1 : i32, i32, i32
  }
  func.func @transform_6(%arg0: i32, %arg1: i32) -> (i32, i32) {
    %c0_i32 = arith.constant 0 : i32
    %c0_i32_0 = arith.constant 0 : i32
    return %arg0, %c0_i32 : i32, i32
  }
  func.func @transform_7(%arg0: i32, %arg1: i32) -> (i32, i32, i32) {
    %c0_i32 = arith.constant 0 : i32
    %c0_i32_0 = arith.constant 0 : i32
    return %arg1, %arg0, %c0_i32 : i32, i32, i32
  }
  func.func @transform_8(%arg0: i32, %arg1: i32) -> (i32, i32, i32) {
    %c0_i32 = arith.constant 0 : i32
    %c0_i32_0 = arith.constant 0 : i32
    return %arg1, %c0_i32, %arg0 : i32, i32, i32
  }
  func.func @transform_9(%arg0: i32, %arg1: i32) -> (i32, i32, i32) {
    %c0_i32 = arith.constant 0 : i32
    %c0_i32_0 = arith.constant 0 : i32
    %c0_i32_1 = arith.constant 0 : i32
    return %arg0, %c0_i32, %c0_i32_0 : i32, i32, i32
  }
}

</mosaic_0001>

<llo_original>
// kernel: _rvq_forward.1
$region0: #{_rvq_forward.1}
  #allocation0 [shape = 'u32[]', space=smem, size = 0x4, offset = 0x4, fixed_abs, tag = 'smem constant byte address 0x4 - core index']
  #allocation1 [shape = 'u32[144,128]{1,0:T(1,128)}', space=vmem, size = 0x12000, scoped, tag = 'internal scratch']
  #allocation2 [shape = 'f32[32,32]{1,0:T(8,128)}', space=vmem, size = 0x4000, scoped, tag = 'scratch operand']
  %s0 = inlined_call_operand.vmem [shape: f32[32,32], index: 0, kind: input, shape index: {}]
  %s1 = inlined_call_operand.vmem [shape: f32[4,32,136], index: 1, kind: input, shape index: {}]
  %s2 = inlined_call_operand.vmem [shape: f32[4,1,136], index: 2, kind: input, shape index: {}]
  %s3 = inlined_call_operand.vmem [shape: f32[4,1,128], index: 3, kind: input, shape index: {}]
  %s4 = inlined_call_operand.vmem [shape: f32[4,128,32], index: 4, kind: input, shape index: {}]
  %s5 = inlined_call_operand.vmem [shape: f32[4,1,32], index: 5, kind: input, shape index: {}]
  %s6 = inlined_call_operand.hbm [shape: f32[32,32], index: 6, kind: output, shape index: {0}]
  %s7 = inlined_call_operand.vmem [shape: s32[4,1,32], index: 7, kind: output, shape index: {1}]
  %s8 = inlined_call_operand.vmem [shape: f32[4,8,32], index: 8, kind: output, shape index: {2}]
  %s9 = inlined_call_operand.hbm [shape: f32[1,1,1], index: 9, kind: output, shape index: {3}]
  %10 = xla_tuple %s6, %s7, %s8, %s9
  %s11 = sld [smem:[#allocation0]]
  $region85: #{_rvq_forward.1} parent=0
    _
  %s13 = ssub.s32 1, %s11
  %s14 = scalar_select 0, %s13, %s11
  $region1: #{_rvq_forward.1} parent=0
    #allocation3 [shape = 'u8[16384]{0}', space=vmem, size = 0x4000, scoped, tag = 'output window, operand 0, single buffered']
    #allocation4 [shape = 's32[2]{0}', space=sflag, size = 0x8, scoped, tag = 'scoped memory for _rvq_forward.1']
    #allocation5 [shape = 'u8[512]{0}', space=vmem, size = 0x400, scoped, tag = 'output window, operand 3, single buffered']
    #allocation6 [shape = 's32[1]{0}', space=sflag, size = 0x4, scoped, tag = 'scoped memory for _rvq_forward.1']
    %15 = vsyncpa [#allocation4], 0
    %16 = vsyncpa [#allocation6], 0
    loop: start=0, step=1, limit=6
    $region2: #{_rvq_forward.1} parent=1 // loop_pre_header
      _
    $region3: #{_rvq_forward.1} parent=1 // loop_header
      %s18 = sphi 0, %s22
      %p19 = scmp.ge.s32.totalorder %s18, 6
      %s25 = sphi 0, %s37
      %s26 = sphi 0, %s33
      %s27 = sphi 0, %s25
      %s28 = sphi 0, %s26
      %s29 = sphi 0, %s27
      %s30 = sphi 0, %s28
      %s40 = sphi 0, %s42
      %s43 = sphi 0, %s40
      %s44 = sphi 0, %s43
      %s60 = sphi 0, %s44
      %s64 = sphi 0, %s64
      %s66 = sphi 0, %s64
      %s67 = sphi 0, %s66
      %s81 = sphi 0, %s67
      %s85 = sphi 0, %s85
      %s87 = sphi 0, %s85
      %s88 = sphi 0, %s87
      %s102 = sphi 0, %s88
      %s106 = sphi 0, %s106
      %s108 = sphi 0, %s106
      %s109 = sphi 0, %s108
      %s123 = sphi 0, %s109
      %s127 = sphi 0, %s127
      %s129 = sphi 0, %s127
      %s130 = sphi 0, %s129
      %s144 = sphi 0, %s130
      %s148 = sphi 0, %s148
      %s150 = sphi 0, %s148
      %s151 = sphi 0, %s150
      %s165 = sphi 0, %s151
      %s171 = sphi 0, %s173
      %s174 = sphi 0, %s171
      %s175 = sphi 0, %s174
      %s191 = sphi 0, %s175
      %s199 = sphi 0, %s201
      %s202 = sphi 0, %s199
      %s203 = sphi 0, %s202
      %s219 = sphi 0, %s203
      %s227 = sphi 0, %s229
      %s230 = sphi 0, %s227
      %s231 = sphi 0, %s230
      %s247 = sphi 0, %s231
      %s253 = sphi 0, %s255
      %s256 = sphi 0, %s253
      %s257 = sphi 0, %s256
      %s273 = sphi 0, %s257
    $region4: #{_rvq_forward.1} parent=1 // loop_header_branch
      %21 = sbr.rel (%p19) target = $region8
    $region5: #{_rvq_forward.1} parent=1 // loop_body
      %s23 = ssub.s32 %s18, 1
      %s24 = ssub.s32 %s18, 2
      %s31 = sadd.s32 1, %s26
      %p32 = scmp.ge.s32.totalorder %s31, 4
      %s33 = scalar_select %p32, 0, %s31
      %s34 = sadd.s32 1, %s25
      %s35 = scalar_select %p32, %s34, %s25
      %p36 = scmp.ge.s32.totalorder %s35, 1
      %s37 = scalar_select %p36, 0, %s35
      %s38 = ssub.s32 %s25, %s37
      %p39 = scmp.eq.s32.totalorder %s38, 0
      %s41 = sadd.s32 %s40, 1
      %s42 = scalar_select %p39, %s40, %s41
      %p45 = pneg %p39
      %p46 = scmp.eq.s32.totalorder %s18, 3
      %p47 = por %p45, %p46
      %p48 = scmp.ne.s32.totalorder %s40, %s43
      %p49 = scmp.eq.s32.totalorder %s18, 0
      %p50 = por %p48, %p49
      %p51 = scmp.ne.s32.totalorder %s40, %s43
      %p52 = scmp.eq.s32.totalorder %s23, 3
      %p53 = por %p51, %p52
      %p54 = scmp.ne.s32.totalorder %s43, %s44
      %p55 = scmp.eq.s32.totalorder %s23, 0
      %p56 = por %p54, %p55
      %p57 = scmp.ne.s32.totalorder %s43, %s44
      %p58 = scmp.eq.s32.totalorder %s24, 3
      %p59 = por %p57, %p58
      %p61 = scmp.ne.s32.totalorder %s44, %s60
      %p62 = scmp.eq.s32.totalorder %s24, 0
      %p63 = por %p61, %p62
      %s65 = sadd.s32 %s64, 1
      %p68 = scmp.eq.s32.totalorder %s18, 3
      %p69 = scmp.ne.s32.totalorder %s64, %s66
      %p70 = scmp.eq.s32.totalorder %s18, 0
      %p71 = por %p69, %p70
      %p72 = scmp.ne.s32.totalorder %s64, %s66
      %p73 = scmp.eq.s32.totalorder %s23, 3
      %p74 = por %p72, %p73
      %p75 = scmp.ne.s32.totalorder %s66, %s67
      %p76 = scmp.eq.s32.totalorder %s23, 0
      %p77 = por %p75, %p76
      %p78 = scmp.ne.s32.totalorder %s66, %s67
      %p79 = scmp.eq.s32.totalorder %s24, 3
      %p80 = por %p78, %p79
      %p82 = scmp.ne.s32.totalorder %s67, %s81
      %p83 = scmp.eq.s32.totalorder %s24, 0
      %p84 = por %p82, %p83
      %s86 = sadd.s32 %s85, 1
      %p89 = scmp.eq.s32.totalorder %s18, 3
      %p90 = scmp.ne.s32.totalorder %s85, %s87
      %p91 = scmp.eq.s32.totalorder %s18, 0
      %p92 = por %p90, %p91
      %p93 = scmp.ne.s32.totalorder %s85, %s87
      %p94 = scmp.eq.s32.totalorder %s23, 3
      %p95 = por %p93, %p94
      %p96 = scmp.ne.s32.totalorder %s87, %s88
      %p97 = scmp.eq.s32.totalorder %s23, 0
      %p98 = por %p96, %p97
      %p99 = scmp.ne.s32.totalorder %s87, %s88
      %p100 = scmp.eq.s32.totalorder %s24, 3
      %p101 = por %p99, %p100
      %p103 = scmp.ne.s32.totalorder %s88, %s102
      %p104 = scmp.eq.s32.totalorder %s24, 0
      %p105 = por %p103, %p104
      %s107 = sadd.s32 %s106, 1
      %p110 = scmp.eq.s32.totalorder %s18, 3
      %p111 = scmp.ne.s32.totalorder %s106, %s108
      %p112 = scmp.eq.s32.totalorder %s18, 0
      %p113 = por %p111, %p112
      %p114 = scmp.ne.s32.totalorder %s106, %s108
      %p115 = scmp.eq.s32.totalorder %s23, 3
      %p116 = por %p114, %p115
      %p117 = scmp.ne.s32.totalorder %s108, %s109
      %p118 = scmp.eq.s32.totalorder %s23, 0
      %p119 = por %p117, %p118
      %p120 = scmp.ne.s32.totalorder %s108, %s109
      %p121 = scmp.eq.s32.totalorder %s24, 3
      %p122 = por %p120, %p121
      %p124 = scmp.ne.s32.totalorder %s109, %s123
      %p125 = scmp.eq.s32.totalorder %s24, 0
      %p126 = por %p124, %p125
      %s128 = sadd.s32 %s127, 1
      %p131 = scmp.eq.s32.totalorder %s18, 3
      %p132 = scmp.ne.s32.totalorder %s127, %s129
      %p133 = scmp.eq.s32.totalorder %s18, 0
      %p134 = por %p132, %p133
      %p135 = scmp.ne.s32.totalorder %s127, %s129
      %p136 = scmp.eq.s32.totalorder %s23, 3
      %p137 = por %p135, %p136
      %p138 = scmp.ne.s32.totalorder %s129, %s130
      %p139 = scmp.eq.s32.totalorder %s23, 0
      %p140 = por %p138, %p139
      %p141 = scmp.ne.s32.totalorder %s129, %s130
      %p142 = scmp.eq.s32.totalorder %s24, 3
      %p143 = por %p141, %p142
      %p145 = scmp.ne.s32.totalorder %s130, %s144
      %p146 = scmp.eq.s32.totalorder %s24, 0
      %p147 = por %p145, %p146
      %s149 = sadd.s32 %s148, 1
      %p152 = scmp.eq.s32.totalorder %s18, 3
      %p153 = scmp.ne.s32.totalorder %s148, %s150
      %p154 = scmp.eq.s32.totalorder %s18, 0
      %p155 = por %p153, %p154
      %p156 = scmp.ne.s32.totalorder %s148, %s150
      %p157 = scmp.eq.s32.totalorder %s23, 3
      %p158 = por %p156, %p157
      %p159 = scmp.ne.s32.totalorder %s150, %s151
      %p160 = scmp.eq.s32.totalorder %s23, 0
      %p161 = por %p159, %p160
      %p162 = scmp.ne.s32.totalorder %s150, %s151
      %p163 = scmp.eq.s32.totalorder %s24, 3
      %p164 = por %p162, %p163
      %p166 = scmp.ne.s32.totalorder %s151, %s165
      %p167 = scmp.eq.s32.totalorder %s24, 0
      %p168 = por %p166, %p167
      %s169 = ssub.s32 %s25, %s37
      %p170 = scmp.eq.s32.totalorder %s169, 0
      %s172 = sadd.s32 %s171, 1
      %s173 = scalar_select %p170, %s171, %s172
      %p176 = pneg %p170
      %p177 = scmp.eq.s32.totalorder %s18, 3
      %p178 = por %p176, %p177
      %p179 = scmp.ne.s32.totalorder %s171, %s174
      %p180 = scmp.eq.s32.totalorder %s18, 0
      %p181 = por %p179, %p180
      %p182 = scmp.ne.s32.totalorder %s171, %s174
      %p183 = scmp.eq.s32.totalorder %s23, 3
      %p184 = por %p182, %p183
      %p185 = scmp.ne.s32.totalorder %s174, %s175
      %p186 = scmp.eq.s32.totalorder %s23, 0
      %p187 = por %p185, %p186
      %p188 = scmp.ne.s32.totalorder %s174, %s175
      %p189 = scmp.eq.s32.totalorder %s24, 3
      %p190 = por %p188, %p189
      %p192 = scmp.ne.s32.totalorder %s175, %s191
      %p193 = scmp.eq.s32.totalorder %s24, 0
      %p194 = por %p192, %p193
      %s195 = ssub.s32 %s26, %s33
      %s196 = ssub.s32 %s25, %s37
      %s197 = sor.u32 %s195, %s196
      %p198 = scmp.eq.s32.totalorder %s197, 0
      %s200 = sadd.s32 %s199, 1
      %s201 = scalar_select %p198, %s199, %s200
      %p204 = pneg %p198
      %p205 = scmp.eq.s32.totalorder %s18, 3
      %p206 = por %p204, %p205
      %p207 = scmp.ne.s32.totalorder %s199, %s202
      %p208 = scmp.eq.s32.totalorder %s18, 0
      %p209 = por %p207, %p208
      %p210 = scmp.ne.s32.totalorder %s199, %s202
      %p211 = scmp.eq.s32.totalorder %s23, 3
      %p212 = por %p210, %p211
      %p213 = scmp.ne.s32.totalorder %s202, %s203
      %p214 = scmp.eq.s32.totalorder %s23, 0
      %p215 = por %p213, %p214
      %p216 = scmp.ne.s32.totalorder %s202, %s203
      %p217 = scmp.eq.s32.totalorder %s24, 3
      %p218 = por %p216, %p217
      %p220 = scmp.ne.s32.totalorder %s203, %s219
      %p221 = scmp.eq.s32.totalorder %s24, 0
      %p222 = por %p220, %p221
      %s223 = ssub.s32 %s26, %s33
      %s224 = ssub.s32 %s25, %s37
      %s225 = sor.u32 %s223, %s224
      %p226 = scmp.eq.s32.totalorder %s225, 0
      %s228 = sadd.s32 %s227, 1
      %s229 = scalar_select %p226, %s227, %s228
      %p232 = pneg %p226
      %p233 = scmp.eq.s32.totalorder %s18, 3
      %p234 = por %p232, %p233
      %p235 = scmp.ne.s32.totalorder %s227, %s230
      %p236 = scmp.eq.s32.totalorder %s18, 0
      %p237 = por %p235, %p236
      %p238 = scmp.ne.s32.totalorder %s227, %s230
      %p239 = scmp.eq.s32.totalorder %s23, 3
      %p240 = por %p238, %p239
      %p241 = scmp.ne.s32.totalorder %s230, %s231
      %p242 = scmp.eq.s32.totalorder %s23, 0
      %p243 = por %p241, %p242
      %p244 = scmp.ne.s32.totalorder %s230, %s231
      %p245 = scmp.eq.s32.totalorder %s24, 3
      %p246 = por %p244, %p245
      %p248 = scmp.ne.s32.totalorder %s231, %s247
      %p249 = scmp.eq.s32.totalorder %s24, 0
      %p250 = por %p248, %p249
      %s251 = ssub.s32 %s25, %s37
      %p252 = scmp.eq.s32.totalorder %s251, 0
      %s254 = sadd.s32 %s253, 1
      %s255 = scalar_select %p252, %s253, %s254
      %p258 = pneg %p252
      %p259 = scmp.eq.s32.totalorder %s18, 3
      %p260 = por %p258, %p259
      %p261 = scmp.ne.s32.totalorder %s253, %s256
      %p262 = scmp.eq.s32.totalorder %s18, 0
      %p263 = por %p261, %p262
      %p264 = scmp.ne.s32.totalorder %s253, %s256
      %p265 = scmp.eq.s32.totalorder %s23, 3
      %p266 = por %p264, %p265
      %p267 = scmp.ne.s32.totalorder %s256, %s257
      %p268 = scmp.eq.s32.totalorder %s23, 0
      %p269 = por %p267, %p268
      %p270 = scmp.ne.s32.totalorder %s256, %s257
      %p271 = scmp.eq.s32.totalorder %s24, 3
      %p272 = por %p270, %p271
      %p274 = scmp.ne.s32.totalorder %s257, %s273
      %p275 = scmp.eq.s32.totalorder %s24, 0
      %p276 = por %p274, %p275
      %p277 = scmp.le.s32.totalorder 1, %s18
      %p278 = scmp.lt.s32.totalorder %s18, 5
      %p279 = pnand %p277, %p278
      %p280 = pneg %p279
      // Predicated region
      $region9: #{_rvq_forward.1} parent=5 // pred_check
        _
      $region10: #{_rvq_forward.1} parent=5 // pred_check_branch
        %282 = sbr.rel (%p279) target = $region12
      $region11: #{_rvq_forward.1} parent=5 // pred_region
        %s283 = ssub.s32 %s18, 1
        // Predicated region
        $region13: #{_rvq_forward.1} parent=11 // pred_check
          %p284 = pneg %p56
        $region14: #{_rvq_forward.1} parent=11 // pred_check_branch
          %286 = sbr.rel (%p284) target = $region16
        $region15: #{_rvq_forward.1} parent=11 // pred_region
          %s287 = smul.u32 4, %s27
          %p288 = scmp.lt.s32.totalorder %s287, 3
          %s289 = scalar_select %p288, %s287, 3
          %s290 = smul.addr %s289, 8
          %s291 = scalar_lea.vmem %s0, %s290
          %s292 = smul.u32 4, %s27
        $region16: #{_rvq_forward.1} parent=11 // pred_fallthru
          _
        // Predicated region
        $region17: #{_rvq_forward.1} parent=11 // pred_check
          %p293 = pneg %p77
        $region18: #{_rvq_forward.1} parent=11 // pred_check_branch
          %295 = sbr.rel (%p293) target = $region20
        $region19: #{_rvq_forward.1} parent=11 // pred_region
          _
        $region20: #{_rvq_forward.1} parent=11 // pred_fallthru
          _
        // Predicated region
        $region21: #{_rvq_forward.1} parent=11 // pred_check
          %p296 = pneg %p98
        $region22: #{_rvq_forward.1} parent=11 // pred_check_branch
          %298 = sbr.rel (%p296) target = $region24
        $region23: #{_rvq_forward.1} parent=11 // pred_region
          _
        $region24: #{_rvq_forward.1} parent=11 // pred_fallthru
          _
        // Predicated region
        $region25: #{_rvq_forward.1} parent=11 // pred_check
          %p299 = pneg %p119
        $region26: #{_rvq_forward.1} parent=11 // pred_check_branch
          %301 = sbr.rel (%p299) target = $region28
        $region27: #{_rvq_forward.1} parent=11 // pred_region
          _
        $region28: #{_rvq_forward.1} parent=11 // pred_fallthru
          _
        // Predicated region
        $region29: #{_rvq_forward.1} parent=11 // pred_check
          %p302 = pneg %p140
        $region30: #{_rvq_forward.1} parent=11 // pred_check_branch
          %304 = sbr.rel (%p302) target = $region32
        $region31: #{_rvq_forward.1} parent=11 // pred_region
          _
        $region32: #{_rvq_forward.1} parent=11 // pred_fallthru
          _
        // Predicated region
        $region33: #{_rvq_forward.1} parent=11 // pred_check
          %p305 = pneg %p161
        $region34: #{_rvq_forward.1} parent=11 // pred_check_branch
          %307 = sbr.rel (%p305) target = $region36
        $region35: #{_rvq_forward.1} parent=11 // pred_region
          _
        $region36: #{_rvq_forward.1} parent=11 // pred_fallthru
          _
      $region12: #{_rvq_forward.1} parent=5 // pred_fallthru
        _
      %p308 = scmp.lt.s32.totalorder %s18, 4
      // Predicated region
      $region37: #{_rvq_forward.1} parent=5 // pred_check
        %p309 = pneg %p308
      $region38: #{_rvq_forward.1} parent=5 // pred_check_branch
        %311 = sbr.rel (%p309) target = $region40
      $region39: #{_rvq_forward.1} parent=5 // pred_region
        _
      $region40: #{_rvq_forward.1} parent=5 // pred_fallthru
        _
      %p312 = scmp.le.s32.totalorder 1, %s18
      %p313 = scmp.lt.s32.totalorder %s18, 5
      %p314 = pnand %p312, %p313
      %p315 = pneg %p314
      // Predicated region
      $region41: #{_rvq_forward.1} parent=5 // pred_check
        _
      $region42: #{_rvq_forward.1} parent=5 // pred_check_branch
        %317 = sbr.rel (%p314) target = $region44
      $region43: #{_rvq_forward.1} parent=5 // pred_region
        %s318 = ssub.s32 %s18, 1
        %s319 = smul.u32 4, %s27
        %p320 = scmp.lt.s32.totalorder %s319, 3
        %s321 = scalar_select %p320, %s319, 3
        %s322 = smul.addr %s321, 8
        %s323 = scalar_lea.vmem %s0, %s322
        %p324 = pneg %p56
        %p325 = pneg %p53
        %p326 = pneg %p77
        %p327 = pneg %p74
        %p328 = pneg %p98
        %p329 = pneg %p95
        %p330 = pneg %p119
        %p331 = pneg %p116
        %p332 = pneg %p140
        %p333 = pneg %p137
        %p334 = pneg %p161
        %p335 = pneg %p158
        %p336 = pneg %p187
        %p337 = pneg %p184
        %p338 = pneg %p215
        %p339 = pneg %p212
        %p340 = scmp.lt.s32.totalorder %s28, 3
        %s341 = scalar_select %p340, %s28, 3
        %p342 = scmp.lt.s32.totalorder %s27, 0
        %s343 = scalar_select %p342, %s27, 0
        %s344 = sadd.s32 %s343, %s341
        %s345 = scalar_lea.vmem %s7, %s344
        %p346 = pneg %p243
        %p347 = pneg %p240
        %p348 = scmp.lt.s32.totalorder %s28, 3
        %s349 = scalar_select %p348, %s28, 3
        %p350 = scmp.lt.s32.totalorder %s27, 0
        %s351 = scalar_select %p350, %s27, 0
        %s352 = sadd.s32 %s351, %s349
        %s353 = smul.addr %s352, 8
        %s354 = scalar_lea.vmem %s8, %s353
        %p355 = pneg %p269
        %p356 = pneg %p266
        %s357 = smul.u32 4, %s27
        %p358 = scmp.lt.s32.totalorder %s357, 3
        %s359 = scalar_select %p358, %s357, 3
        %s360 = smul.addr %s359, 8
        %s361 = scalar_lea.vmem %s0, %s360
        %s362 = smul.u32 4, %s27
        %s363 = smul.u32 4, %s27
        %p364 = scmp.lt.s32.totalorder %s28, 3
        %s365 = scalar_select %p364, %s28, 3
        %p366 = scmp.lt.s32.totalorder %s27, 0
        %s367 = scalar_select %p366, %s27, 0
        %s368 = sadd.s32 %s367, %s365
        %s369 = scalar_lea.vmem %s7, %s368
        %p370 = scmp.lt.s32.totalorder %s28, 3
        %s371 = scalar_select %p370, %s28, 3
        %p372 = scmp.lt.s32.totalorder %s27, 0
        %s373 = scalar_select %p372, %s27, 0
        %s374 = sadd.s32 %s373, %s371
        %s375 = smul.addr %s374, 8
        %s376 = scalar_lea.vmem %s8, %s375
        %p377 = scmp.eq.s32.totalorder %s28, 0
        // Predicated region
        $region45: #{_rvq_forward.1} parent=43 // pred_check
          %p378 = pneg %p377
        $region46: #{_rvq_forward.1} parent=43 // pred_check_branch
          %380 = sbr.rel (%p378) target = $region48
        $region47: #{_rvq_forward.1} parent=43 // pred_region
          %v381 = vld [vmem:[%s361] sm:$0xff]
          %v382 = vld [vmem:[%s361 + $0x8] sm:$0xff]
          %v383 = vld [vmem:[%s361 + $0x10] sm:$0xff]
          %v384 = vld [vmem:[%s361 + $0x18] sm:$0xff]
          %vm385 = vcmask 261120
          %386 = vst.msk [vmem:[#allocation2] sm:$0xff] %vm385, %v381
          %387 = vst.msk [vmem:[#allocation2 + $0x8] sm:$0xff] %vm385, %v382
          %388 = vst.msk [vmem:[#allocation2 + $0x10] sm:$0xff] %vm385, %v383
          %389 = vst.msk [vmem:[#allocation2 + $0x18] sm:$0xff] %vm385, %v384
          %390 = vst.msk [vmem:[#allocation3] sm:$0xff] %vm385, 0.0
          %391 = vst.msk [vmem:[#allocation3 + $0x8] sm:$0xff] %vm385, 0.0
          %392 = vst.msk [vmem:[#allocation3 + $0x10] sm:$0xff] %vm385, 0.0
          %393 = vst.msk [vmem:[#allocation3 + $0x18] sm:$0xff] %vm385, 0.0
          %vm394 = vcmask 0
          %395 = vst.msk [vmem:[#allocation5] sm:$0x1] %vm394, 0.0
        $region48: #{_rvq_forward.1} parent=43 // pred_fallthru
          _
        %v396 = vld [vmem:[#allocation2] sm:$0xff]
        %v397 = vld [vmem:[#allocation2 + $0x8] sm:$0xff]
        %v398 = vld [vmem:[#allocation2 + $0x10] sm:$0xff]
        %v399 = vld [vmem:[#allocation2 + $0x18] sm:$0xff]
        %s400 = smul.u32 %s28, 8
        %s401 = smul.addr %s400, 8
        %s402 = scalar_lea.vmem %s1, %s401
        %v403 = vld [vmem:[%s402] sm:$0xff]
        %v404 = vld [vmem:[%s402 + $0x8] sm:$0xff]
        %v405 = vld [vmem:[%s402 + $0x10] sm:$0xff]
        %v406 = vld [vmem:[%s402 + $0x18] sm:$0xff]
        %v407 = vld [vmem:[%s402 + $0x20] sm:$0xff]
        %v408 = vld [vmem:[%s402 + $0x28] sm:$0xff]
        %v409 = vld [vmem:[%s402 + $0x30] sm:$0xff]
        %v410 = vld [vmem:[%s402 + $0x38] sm:$0xff]
        %s411 = smul.u32 %s28, 2
        %s412 = scalar_lea.vmem %s2, %s411
        %v413 = vld [vmem:[%s412] sm:$0x3]
        %v415 = vlaneseq
        %v416 = vshrl.u32 %v415, 7
        %v417 = vsub.s32 0, %v416
        %v418 = vrot.slane %v413, %v417
        %v419 = vlaneseq
        %v420 = vshrl.u32 %v419, 7
        %v421 = vsub.s32 1, %v420
        %v422 = vrot.slane %v413, %v421
        %vm425 = vcmask 261120
        %v427 = vsel %vm425, %v396, 0
        %v430 = vsel %vm425, %v397, 0
        %v433 = vsel %vm425, %v398, 0
        %v436 = vsel %vm425, %v399, 0
        %438 = vmatprep.subr.mxu0 0.0
        %439 = vmatpush1.msra.mxu0 0.0
        %440 = vmatprep.subr.mxu0 0.0
        %441 = vmatpush1.msra.mxu0 0.0
        %442 = vmatprep.subr.mxu0 0.0
        %443 = vmatpush1.msra.mxu0 0.0
        %444 = vmatprep.subr.mxu0 0.0
        %445 = vmatpush1.msra.mxu0 0.0
        %446 = vmatprep.subr.mxu0 0.0
        %447 = vmatpush1.msra.mxu0 0.0
        %448 = vmatprep.subr.mxu0 0.0
        %449 = vmatpush1.msra.mxu0 0.0
        %450 = vmatprep.subr.mxu0 0.0
        %451 = vmatpush1.msra.mxu0 0.0
        %452 = vmatprep.subr.mxu0 0.0
        %453 = vmatpush1.msra.mxu0 0.0
        %454 = vmatprep.subr.mxu0 0.0
        %455 = vmatpush1.msra.mxu0 0.0
        %456 = vmatprep.subr.mxu0 0.0
        %457 = vmatpush1.msra.mxu0 0.0
        %458 = vmatprep.subr.mxu0 0.0
        %459 = vmatpush1.msra.mxu0 0.0
        %460 = vmatprep.subr.mxu0 0.0
        %461 = vmatpush1.msra.mxu0 0.0
        %462 = vmatprep.subr.mxu0 %v410
        %463 = vmatpush1.msra.mxu0 %v409
        %464 = vmatprep.subr.mxu0 %v408
        %465 = vmatpush1.msra.mxu0 %v407
        %466 = vmatprep.subr.mxu0 %v406
        %467 = vmatpush1.msra.mxu0 %v405
        %468 = vmatprep.subr.mxu0 %v404
        %469 = vmatpush1.msra.mxu0 %v403
        %470 = vmatprep.subr.mxu0 0.0
        %471 = vmatpush2.msra.mxu0 0.0
        %472 = vmatprep.subr.mxu0 0.0
        %473 = vmatpush2.msra.mxu0 0.0
        %474 = vmatprep.subr.mxu0 0.0
        %475 = vmatpush2.msra.mxu0 0.0
        %476 = vmatprep.subr.mxu0 0.0
        %477 = vmatpush2.msra.mxu0 0.0
        %478 = vmatprep.subr.mxu0 0.0
        %479 = vmatpush2.msra.mxu0 0.0
        %480 = vmatprep.subr.mxu0 0.0
        %481 = vmatpush2.msra.mxu0 0.0
        %482 = vmatprep.subr.mxu0 0.0
        %483 = vmatpush2.msra.mxu0 0.0
        %484 = vmatprep.subr.mxu0 0.0
        %485 = vmatpush2.msra.mxu0 0.0
        %486 = vmatprep.subr.mxu0 0.0
        %487 = vmatpush2.msra.mxu0 0.0
        %488 = vmatprep.subr.mxu0 0.0
        %489 = vmatpush2.msra.mxu0 0.0
        %490 = vmatprep.subr.mxu0 0.0
        %491 = vmatpush2.msra.mxu0 0.0
        %492 = vmatprep.subr.mxu0 0.0
        %493 = vmatpush2.msra.mxu0 0.0
        %494 = vmatprep.subr.mxu0 0.0
        %495 = vmatpush2.msra.mxu0 0.0
        %496 = vmatprep.subr.mxu0 0.0
        %497 = vmatpush2.msra.mxu0 0.0
        %498 = vmatprep.subr.mxu0 0.0
        %499 = vmatpush2.msra.mxu0 0.0
        %500 = vmatprep.subr.mxu0 0.0
        %501 = vmatpush2.msra.mxu0 0.0
        %502 = vmatprep.mubr.f32.mxu0 0.0
        %503 = vmatmul.mubr.f32.gmra.mxu0 %v427
        %v504 = vpop.f32.mrf.mxu0
        %v505 = vadd.f32 %v418, %v504
        %v506 = vpop.f32.mrf.mxu0
        %v507 = vadd.f32 %v422, %v506
        %508 = vmatprep.mubr.f32.mxu0 0.0
        %509 = vmatmul.mubr.f32.gmra.mxu0 %v430
        %v510 = vpop.f32.mrf.mxu0
        %v511 = vadd.f32 %v418, %v510
        %v512 = vpop.f32.mrf.mxu0
        %v513 = vadd.f32 %v422, %v512
        %514 = vmatprep.mubr.f32.mxu0 0.0
        %515 = vmatmul.mubr.f32.gmra.mxu0 %v433
        %v516 = vpop.f32.mrf.mxu0
        %v517 = vadd.f32 %v418, %v516
        %v518 = vpop.f32.mrf.mxu0
        %v519 = vadd.f32 %v422, %v518
        %520 = vmatprep.mubr.f32.mxu0 0.0
        %521 = vmatmul.mubr.f32.gmra.mxu0 %v436
        %v522 = vpop.f32.mrf.mxu0
        %v523 = vadd.f32 %v418, %v522
        %v524 = vpop.f32.mrf.mxu0
        %v525 = vadd.f32 %v422, %v524
        %526 = vdwg.mxu0
        %527 = vmax.index.xlane.f32.xlu0 %v505
        %v528 = vpop.xlane.xlu0 %527
        %529 = vmax.index.xlane.f32.xlu0 %v511
        %v530 = vpop.xlane.xlu0 %529
        %531 = vmax.index.xlane.f32.xlu0 %v517
        %v532 = vpop.xlane.xlu0 %531
        %533 = vmax.index.xlane.f32.xlu0 %v523
        %v534 = vpop.xlane.xlu0 %533
        %535 = vmax.xlane.f32.xlu0 %v505
        %v536 = vpop.xlane.xlu0 %535
        %537 = vmax.xlane.f32.xlu0 %v511
        %v538 = vpop.xlane.xlu0 %537
        %539 = vmax.xlane.f32.xlu0 %v517
        %v540 = vpop.xlane.xlu0 %539
        %541 = vmax.xlane.f32.xlu0 %v523
        %v542 = vpop.xlane.xlu0 %541
        %v543 = vlaneseq
        %v544 = vand.u32 %v543, 127
        %vm545 = vcmp.eq.s32.totalorder %v528, %v544
        %vm546 = vcmp.eq.s32.totalorder %v530, %v544
        %vm547 = vcmp.eq.s32.totalorder %v532, %v544
        %vm548 = vcmp.eq.s32.totalorder %v534, %v544
        %v549 = vsel %vm545, 1, 0
        %v550 = vsel %vm546, 1, 0
        %v551 = vsel %vm547, 1, 0
        %v552 = vsel %vm548, 1, 0
        %v553 = vcvt.s32.f32 %v549
        %v554 = vcvt.s32.f32 %v550
        %v555 = vcvt.s32.f32 %v551
        %v556 = vcvt.s32.f32 %v552
        %s557 = smul.u32 %s28, 128
        %s558 = scalar_lea.vmem %s4, %s557
        %v559 = vld [vmem:[%s558] sm:$0xff]
        %v560 = vld [vmem:[%s558 + $0x8] sm:$0xff]
        %v561 = vld [vmem:[%s558 + $0x10] sm:$0xff]
        %v562 = vld [vmem:[%s558 + $0x18] sm:$0xff]
        %v563 = vld [vmem:[%s558 + $0x20] sm:$0xff]
        %v564 = vld [vmem:[%s558 + $0x28] sm:$0xff]
        %v565 = vld [vmem:[%s558 + $0x30] sm:$0xff]
        %v566 = vld [vmem:[%s558 + $0x38] sm:$0xff]
        %v567 = vld [vmem:[%s558 + $0x40] sm:$0xff]
        %v568 = vld [vmem:[%s558 + $0x48] sm:$0xff]
        %v569 = vld [vmem:[%s558 + $0x50] sm:$0xff]
        %v570 = vld [vmem:[%s558 + $0x58] sm:$0xff]
        %v571 = vld [vmem:[%s558 + $0x60] sm:$0xff]
        %v572 = vld [vmem:[%s558 + $0x68] sm:$0xff]
        %v573 = vld [vmem:[%s558 + $0x70] sm:$0xff]
        %v574 = vld [vmem:[%s558 + $0x78] sm:$0xff]
        %s575 = scalar_lea.vmem %s5, %s28
        %v576 = vld [vmem:[%s575] sm:$0x1]
        %v578 = vlaneseq
        %v579 = vshrl.u32 %v578, 7
        %v580 = vsub.s32 0, %v579
        %v581 = vrot.slane %v576, %v580
        %583 = vmatprep.subr.mxu0 0.0
        %584 = vmatpush1.msra.mxu0 %v574
        %585 = vmatprep.subr.mxu0 0.0
        %586 = vmatpush1.msra.mxu0 %v573
        %587 = vmatprep.subr.mxu0 0.0
        %588 = vmatpush1.msra.mxu0 %v572
        %589 = vmatprep.subr.mxu0 0.0
        %590 = vmatpush1.msra.mxu0 %v571
        %591 = vmatprep.subr.mxu0 0.0
        %592 = vmatpush1.msra.mxu0 %v570
        %593 = vmatprep.subr.mxu0 0.0
        %594 = vmatpush1.msra.mxu0 %v569
        %595 = vmatprep.subr.mxu0 0.0
        %596 = vmatpush1.msra.mxu0 %v568
        %597 = vmatprep.subr.mxu0 0.0
        %598 = vmatpush1.msra.mxu0 %v567
        %599 = vmatprep.subr.mxu0 0.0
        %600 = vmatpush1.msra.mxu0 %v566
        %601 = vmatprep.subr.mxu0 0.0
        %602 = vmatpush1.msra.mxu0 %v565
        %603 = vmatprep.subr.mxu0 0.0
        %604 = vmatpush1.msra.mxu0 %v564
        %605 = vmatprep.subr.mxu0 0.0
        %606 = vmatpush1.msra.mxu0 %v563
        %607 = vmatprep.subr.mxu0 0.0
        %608 = vmatpush1.msra.mxu0 %v562
        %609 = vmatprep.subr.mxu0 0.0
        %610 = vmatpush1.msra.mxu0 %v561
        %611 = vmatprep.subr.mxu0 0.0
        %612 = vmatpush1.msra.mxu0 %v560
        %613 = vmatprep.subr.mxu0 0.0
        %614 = vmatpush1.msra.mxu0 %v559
        %615 = vmatprep.subr.mxu0 0.0
        %616 = vmatpush2.msra.mxu0 0.0
        %617 = vmatprep.subr.mxu0 0.0
        %618 = vmatpush2.msra.mxu0 0.0
        %619 = vmatprep.subr.mxu0 0.0
        %620 = vmatpush2.msra.mxu0 0.0
        %621 = vmatprep.subr.mxu0 0.0
        %622 = vmatpush2.msra.mxu0 0.0
        %623 = vmatprep.subr.mxu0 0.0
        %624 = vmatpush2.msra.mxu0 0.0
        %625 = vmatprep.subr.mxu0 0.0
        %626 = vmatpush2.msra.mxu0 0.0
        %627 = vmatprep.subr.mxu0 0.0
        %628 = vmatpush2.msra.mxu0 0.0
        %629 = vmatprep.subr.mxu0 0.0
        %630 = vmatpush2.msra.mxu0 0.0
        %631 = vmatprep.subr.mxu0 0.0
        %632 = vmatpush2.msra.mxu0 0.0
        %633 = vmatprep.subr.mxu0 0.0
        %634 = vmatpush2.msra.mxu0 0.0
        %635 = vmatprep.subr.mxu0 0.0
        %636 = vmatpush2.msra.mxu0 0.0
        %637 = vmatprep.subr.mxu0 0.0
        %638 = vmatpush2.msra.mxu0 0.0
        %639 = vmatprep.subr.mxu0 0.0
        %640 = vmatpush2.msra.mxu0 0.0
        %641 = vmatprep.subr.mxu0 0.0
        %642 = vmatpush2.msra.mxu0 0.0
        %643 = vmatprep.subr.mxu0 0.0
        %644 = vmatpush2.msra.mxu0 0.0
        %645 = vmatprep.subr.mxu0 0.0
        %646 = vmatpush2.msra.mxu0 0.0
        %647 = vmatprep.mubr.f32.mxu0 0.0
        %648 = vmatmul.mubr.f32.gmra.mxu0 %v553
        %v649 = vpop.f32.mrf.mxu0
        %v650 = vadd.f32 %v581, %v649
        %v651 = vpop.f32.mrf.mxu0
        %652 = vmatprep.mubr.f32.mxu0 0.0
        %653 = vmatmul.mubr.f32.gmra.mxu0 %v554
        %v654 = vpop.f32.mrf.mxu0
        %v655 = vadd.f32 %v581, %v654
        %v656 = vpop.f32.mrf.mxu0
        %657 = vmatprep.mubr.f32.mxu0 0.0
        %658 = vmatmul.mubr.f32.gmra.mxu0 %v555
        %v659 = vpop.f32.mrf.mxu0
        %v660 = vadd.f32 %v581, %v659
        %v661 = vpop.f32.mrf.mxu0
        %662 = vmatprep.mubr.f32.mxu0 0.0
        %663 = vmatmul.mubr.f32.gmra.mxu0 %v556
        %v664 = vpop.f32.mrf.mxu0
        %v665 = vadd.f32 %v581, %v664
        %v666 = vpop.f32.mrf.mxu0
        %667 = vdwg.mxu0
        %s668 = scalar_lea.vmem %s3, %s28
        %v669 = vld [vmem:[%s668] sm:$0x1]
        %v671 = vlaneseq
        %v672 = vshrl.u32 %v671, 7
        %v673 = vsub.s32 0, %v672
        %v674 = vrot.slane %v669, %v673
        %v676 = vmul.f32 %v553, %v674
        %v677 = vmul.f32 %v554, %v674
        %v678 = vmul.f32 %v555, %v674
        %v679 = vmul.f32 %v556, %v674
        %680 = vadd.xlane.f32.xlu0 %v676
        %v681 = vpop.xlane.xlu0 %680
        %682 = vadd.xlane.f32.xlu0 %v677
        %v683 = vpop.xlane.xlu0 %682
        %684 = vadd.xlane.f32.xlu0 %v678
        %v685 = vpop.xlane.xlu0 %684
        %686 = vadd.xlane.f32.xlu0 %v679
        %v687 = vpop.xlane.xlu0 %686
        %v688 = vmul.f32 %v507, %v507
        %v689 = vmul.f32 %v513, %v513
        %v690 = vmul.f32 %v519, %v519
        %v691 = vmul.f32 %v525, %v525
        %vm692 = vcmask 64512
        %v693 = vsel %vm692, %v688, 0.0
        %v694 = vsel %vm692, %v689, 0.0
        %v695 = vadd.f32 %v693, %v694
        %v696 = vsel %vm692, %v690, 0.0
        %v697 = vadd.f32 %v695, %v696
        %v698 = vsel %vm692, %v691, 0.0
        %v699 = vadd.f32 %v697, %v698
        %700 = vadd.xlane.f32.xlu0 %v699
        %v701 = vpop.xlane.xlu0 %700
        %v702 = vrot.slane %v701, 4
        %v703 = vadd.f32 %v701, %v702
        %v704 = vrot.slane %v703, 2
        %v705 = vadd.f32 %v703, %v704
        %v706 = vrot.slane %v705, 1
        %v707 = vadd.f32 %v705, %v706
        %s708 = vtos %v707
        %v709 = vmul.f32 %v536, %v681
        %v710 = vmul.f32 %v538, %v683
        %v711 = vmul.f32 %v540, %v685
        %v712 = vmul.f32 %v542, %v687
        %vm713 = vcmask 7168
        %v714 = vsel %vm713, %v709, 0.0
        %v715 = vsel %vm713, %v710, 0.0
        %v716 = vadd.f32 %v714, %v715
        %v717 = vsel %vm713, %v711, 0.0
        %v718 = vadd.f32 %v716, %v717
        %v719 = vsel %vm713, %v712, 0.0
        %v720 = vadd.f32 %v718, %v719
        %721 = vadd.xlane.f32.xlu0 %v720
        %v722 = vpop.xlane.xlu0 %721
        %v723 = vrot.slane %v722, 4
        %v724 = vadd.f32 %v722, %v723
        %v725 = vrot.slane %v724, 2
        %v726 = vadd.f32 %v724, %v725
        %v727 = vrot.slane %v726, 1
        %v728 = vadd.f32 %v726, %v727
        %s729 = vtos %v728
        %s730 = smul.f32 %s729, 2.0
        %s731 = ssub.f32 %s708, %s730
        %v732 = vmul.f32 %v681, %v681
        %v733 = vmul.f32 %v683, %v683
        %v734 = vmul.f32 %v685, %v685
        %v735 = vmul.f32 %v687, %v687
        %v736 = vsel %vm713, %v732, 0.0
        %v737 = vsel %vm713, %v733, 0.0
        %v738 = vadd.f32 %v736, %v737
        %v739 = vsel %vm713, %v734, 0.0
        %v740 = vadd.f32 %v738, %v739
        %v741 = vsel %vm713, %v735, 0.0
        %v742 = vadd.f32 %v740, %v741
        %743 = vadd.xlane.f32.xlu0 %v742
        %v744 = vpop.xlane.xlu0 %743
        %v745 = vrot.slane %v744, 4
        %v746 = vadd.f32 %v744, %v745
        %v747 = vrot.slane %v746, 2
        %v748 = vadd.f32 %v746, %v747
        %v749 = vrot.slane %v748, 1
        %v750 = vadd.f32 %v748, %v749
        %s751 = vtos %v750
        %s752 = sadd.f32 %s731, %s751
        %v753 = vld [vmem:[#allocation5] sm:$0x1]
        %s754 = smul.f32 %s752, 0.00390625
        %v755 = vstv %s754
        %v756 = vadd.f32 %v753, %v755
        %vm757 = vcmask 0
        %758 = vst.msk [vmem:[#allocation5] sm:$0x1] %vm757, %v756
        %v759 = vld [vmem:[#allocation3] sm:$0xff]
        %v760 = vld [vmem:[#allocation3 + $0x8] sm:$0xff]
        %v761 = vld [vmem:[#allocation3 + $0x10] sm:$0xff]
        %v762 = vld [vmem:[#allocation3 + $0x18] sm:$0xff]
        %v763 = vadd.f32 %v759, %v650
        %v764 = vadd.f32 %v760, %v655
        %v765 = vadd.f32 %v761, %v660
        %v766 = vadd.f32 %v762, %v665
        %767 = vst.msk [vmem:[#allocation3] sm:$0xff] %vm425, %v763
        %768 = vst.msk [vmem:[#allocation3 + $0x8] sm:$0xff] %vm425, %v764
        %769 = vst.msk [vmem:[#allocation3 + $0x10] sm:$0xff] %vm425, %v765
        %770 = vst.msk [vmem:[#allocation3 + $0x18] sm:$0xff] %vm425, %v766
        %v771 = vsub.f32 %v396, %v650
        %v772 = vsub.f32 %v397, %v655
        %v773 = vsub.f32 %v398, %v660
        %v774 = vsub.f32 %v399, %v665
        %775 = vst.msk [vmem:[#allocation2] sm:$0xff] %vm425, %v771
        %776 = vst.msk [vmem:[#allocation2 + $0x8] sm:$0xff] %vm425, %v772
        %777 = vst.msk [vmem:[#allocation2 + $0x10] sm:$0xff] %vm425, %v773
        %778 = vst.msk [vmem:[#allocation2 + $0x18] sm:$0xff] %vm425, %v774
        %v779 = vlaneseq
        %v780 = vshrl.u32 %v779, 7
        %v781 = vsub.s32 %v544, %v780
        %v782 = vrot.slane %v528, %v781
        %v783 = vadd.s32 %v544, 4294967288
        %v784 = vlaneseq
        %v785 = vshrl.u32 %v784, 7
        %v786 = vsub.s32 %v783, %v785
        %v787 = vrot.slane %v530, %v786
        %vm788 = vcmask 130112
        %v789 = vsel %vm788, %v787, %v782
        %v790 = vadd.s32 %v544, 4294967280
        %v791 = vlaneseq
        %v792 = vshrl.u32 %v791, 7
        %v793 = vsub.s32 %v790, %v792
        %v794 = vrot.slane %v532, %v793
        %vm795 = vcmask 195712
        %v796 = vsel %vm795, %v794, %v789
        %v797 = vadd.s32 %v544, 4294967272
        %v798 = vlaneseq
        %v799 = vshrl.u32 %v798, 7
        %v800 = vsub.s32 %v797, %v799
        %v801 = vrot.slane %v534, %v800
        %vm802 = vcmask 261312
        %v803 = vsel %vm802, %v801, %v796
        %vm804 = vcmask 253952
        %805 = vst.msk [vmem:[%s369] sm:$0x1] %vm804, %v803
        %806 = vxpose.xlu0.b32.start [1/16] %v507, 128
        %807 = vxpose.xlu0.b32.cont [2/16] %v513, 128
        %808 = vxpose.xlu0.b32.cont [3/16] %v519, 128
        %809 = vxpose.xlu0.b32.cont [4/16] %v525, 128
        %810 = vxpose.xlu0.b32.cont [5/16] 0.0, 128
        %811 = vxpose.xlu0.b32.cont [6/16] 0.0, 128
        %812 = vxpose.xlu0.b32.cont [7/16] 0.0, 128
        %813 = vxpose.xlu0.b32.cont [8/16] 0.0, 128
        %814 = vxpose.xlu0.b32.cont [9/16] 0.0, 128
        %815 = vxpose.xlu0.b32.cont [10/16] 0.0, 128
        %816 = vxpose.xlu0.b32.cont [11/16] 0.0, 128
        %817 = vxpose.xlu0.b32.cont [12/16] 0.0, 128
        %818 = vxpose.xlu0.b32.cont [13/16] 0.0, 128
        %819 = vxpose.xlu0.b32.cont [14/16] 0.0, 128
        %820 = vxpose.xlu0.b32.cont [15/16] 0.0, 128
        %821 = vxpose.xlu0.b32.end [16/16] 0.0, 128
        %v822 = vpop.trf.xlu0
        %v823 = vpop.trf.xlu0
        %v824 = vpop.trf.xlu0
        %v825 = vpop.trf.xlu0
        %v826 = vpop.trf.xlu0
        %v827 = vpop.trf.xlu0
        %v828 = vpop.trf.xlu0
        %v829 = vpop.trf.xlu0
        %v830 = vpop.trf.xlu0
        %v831 = vpop.trf.xlu0
        %v832 = vpop.trf.xlu0
        %v833 = vpop.trf.xlu0
        %v834 = vpop.trf.xlu0
        %v835 = vpop.trf.xlu0
        %v836 = vpop.trf.xlu0
        %v837 = vpop.trf.xlu0
        %838 = vst.msk [vmem:[%s376] sm:$0xff] %vm425, %v822
        %p839 = scmp.lt.s32.totalorder %s28, 3
        %s840 = scalar_select %p839, %s28, 3
        %p841 = scmp.lt.s32.totalorder %s27, 0
        %s842 = scalar_select %p841, %s27, 0
        %s843 = sadd.s32 %s842, %s840
        %s844 = scalar_lea.vmem %s7, %s843
        %p845 = scmp.lt.s32.totalorder %s28, 3
        %s846 = scalar_select %p845, %s28, 3
        %p847 = scmp.lt.s32.totalorder %s27, 0
        %s848 = scalar_select %p847, %s27, 0
        %s849 = sadd.s32 %s848, %s846
        %s850 = smul.addr %s849, 8
        %s851 = scalar_lea.vmem %s8, %s850
        // Predicated region
        $region49: #{_rvq_forward.1} parent=43 // pred_check
          %p852 = pneg %p184
        $region50: #{_rvq_forward.1} parent=43 // pred_check_branch
          %854 = sbr.rel (%p852) target = $region52
        $region51: #{_rvq_forward.1} parent=43 // pred_region
          %s855 = smul.u32 4, %s27
          %s857 = ssub.s32 512, 512
          %858 = vsyncadd [#allocation4], %s857
          %s859 = smul.addr %s855, 128
          %s860 = scalar_lea.hbm %s6, %s859
          %s861 = sshll.u32 [#allocation3], 4
          %s862 = int_to_ptr.vmem [resolvable:$true] %s861
          %867 = dma.vmem_to_hbm [thread:$0]  %s862, 512, %s860, [#allocation4], 128, 128, 8
        $region52: #{_rvq_forward.1} parent=43 // pred_fallthru
          _
        // Predicated region
        $region53: #{_rvq_forward.1} parent=43 // pred_check
          %p868 = pneg %p212
        $region54: #{_rvq_forward.1} parent=43 // pred_check_branch
          %870 = sbr.rel (%p868) target = $region56
        $region55: #{_rvq_forward.1} parent=43 // pred_region
          _
        $region56: #{_rvq_forward.1} parent=43 // pred_fallthru
          _
        // Predicated region
        $region57: #{_rvq_forward.1} parent=43 // pred_check
          %p871 = pneg %p240
        $region58: #{_rvq_forward.1} parent=43 // pred_check_branch
          %873 = sbr.rel (%p871) target = $region60
        $region59: #{_rvq_forward.1} parent=43 // pred_region
          _
        $region60: #{_rvq_forward.1} parent=43 // pred_fallthru
          _
        // Predicated region
        $region61: #{_rvq_forward.1} parent=43 // pred_check
          %p874 = pneg %p266
        $region62: #{_rvq_forward.1} parent=43 // pred_check_branch
          %876 = sbr.rel (%p874) target = $region64
        $region63: #{_rvq_forward.1} parent=43 // pred_region
          %s878 = ssub.s32 16, 16
          %879 = vsyncadd [#allocation6], %s878
          %s880 = smul.addr %s27, 16
          %s881 = scalar_lea.hbm %s9, %s880
          %s883 = sshll.u32 [#allocation5], 4
          %s884 = int_to_ptr.vmem [resolvable:$true] %s883
          %886 = dma.vmem_to_hbm [thread:$0]  %s884, 16, %s881, [#allocation6]
        $region64: #{_rvq_forward.1} parent=43 // pred_fallthru
          _
        // Predicated region
        $region65: #{_rvq_forward.1} parent=43 // pred_check
          %p887 = pneg %p184
        $region66: #{_rvq_forward.1} parent=43 // pred_check_branch
          %889 = sbr.rel (%p887) target = $region68
        $region67: #{_rvq_forward.1} parent=43 // pred_region
          %890 = dma.done [#allocation4], 512
        $region68: #{_rvq_forward.1} parent=43 // pred_fallthru
          _
        // Predicated region
        $region69: #{_rvq_forward.1} parent=43 // pred_check
          %p891 = pneg %p266
        $region70: #{_rvq_forward.1} parent=43 // pred_check_branch
          %893 = sbr.rel (%p891) target = $region72
        $region71: #{_rvq_forward.1} parent=43 // pred_region
          %894 = dma.done [#allocation6], 16
        $region72: #{_rvq_forward.1} parent=43 // pred_fallthru
          _
      $region44: #{_rvq_forward.1} parent=5 // pred_fallthru
        _
      %p895 = scmp.le.s32.totalorder 2, %s18
      // Predicated region
      $region73: #{_rvq_forward.1} parent=5 // pred_check
        %p896 = pneg %p895
      $region74: #{_rvq_forward.1} parent=5 // pred_check_branch
        %898 = sbr.rel (%p896) target = $region76
      $region75: #{_rvq_forward.1} parent=5 // pred_region
        %s899 = ssub.s32 %s18, 2
        // Predicated region
        $region77: #{_rvq_forward.1} parent=75 // pred_check
          %p900 = pneg %p218
        $region78: #{_rvq_forward.1} parent=75 // pred_check_branch
          %902 = sbr.rel (%p900) target = $region80
        $region79: #{_rvq_forward.1} parent=75 // pred_region
          %p903 = scmp.lt.s32.totalorder %s30, 3
          %s904 = scalar_select %p903, %s30, 3
          %p905 = scmp.lt.s32.totalorder %s29, 0
          %s906 = scalar_select %p905, %s29, 0
          %s907 = sadd.s32 %s906, %s904
          %s908 = scalar_lea.vmem %s7, %s907
        $region80: #{_rvq_forward.1} parent=75 // pred_fallthru
          _
        // Predicated region
        $region81: #{_rvq_forward.1} parent=75 // pred_check
          %p909 = pneg %p246
        $region82: #{_rvq_forward.1} parent=75 // pred_check_branch
          %911 = sbr.rel (%p909) target = $region84
        $region83: #{_rvq_forward.1} parent=75 // pred_region
          %p912 = scmp.lt.s32.totalorder %s30, 3
          %s913 = scalar_select %p912, %s30, 3
          %p914 = scmp.lt.s32.totalorder %s29, 0
          %s915 = scalar_select %p914, %s29, 0
          %s916 = sadd.s32 %s915, %s913
          %s917 = smul.addr %s916, 8
          %s918 = scalar_lea.vmem %s8, %s917
        $region84: #{_rvq_forward.1} parent=75 // pred_fallthru
          _
      $region76: #{_rvq_forward.1} parent=5 // pred_fallthru
        _
    $region6: #{_rvq_forward.1} parent=1 // loop_footer
      %s22 = sadd.s32 1, %s18
    $region7: #{_rvq_forward.1} parent=1 // loop_footer_branch
      %17 = sbr.rel target = $region3
    $region8: #{_rvq_forward.1} parent=1 // loop_exit
      _
    %919 = vsyncpa [#allocation4], 1
    %s920 = scalar_lea.sflag [#allocation4], 1
    %921 = vsyncpa %s920, 1
    %922 = vsyncpa [#allocation6], 1

</llo_original>
